<compile_context>
chip_gen: v6e
topology: v6e:2x2x1
jax: 0.10.0
libtpu: 0.0.40
codegen_flags: <defaults>
</compile_context>

<pallas_src>
import jax
import jax.numpy as jnp
from jax.experimental import pallas as pl
from jax.experimental.pallas import tpu as pltpu

BN_EPS = 1e-5


def _conv_layer_kernel(x_ref, w_ref, g_ref, beta_ref, out_ref, m_ref):
    # x_ref    : (B, L, C)   input, NLC layout (C on lanes), matmul dtype
    # w_ref    : (3, C, C)   w_ref[k][i, o] = conv_w[o, i, k], matmul dtype
    # g_ref    : (1, C)      BN gamma (f32)
    # beta_ref : (1, C)      BN beta  (f32)
    # out_ref  : (B, Lp, C)  pooled output (f32)
    # m_ref    : (B, Lc, C)  f32 VMEM scratch: 3-way running max before downsample
    B, L, C = x_ref.shape
    Lc = L + 2                       # conv output length (k=3, circular pad=2)
    Lp = out_ref.shape[1]            # pool output length  (k=3, s=2, p=1)

    x = x_ref[...]                   # stays in matmul dtype (bf16 or f32)

    # ---- Conv1d(k=3, circular pad=2): three accumulated MXU matmuls -----------------
    # Tap k at output position t reads x[(t + k - 2) mod L]; build each shifted view
    # with static concatenations along L (no 3C-wide im2col buffer, no bias add).
    x0 = jnp.concatenate([x[:, L - 2:, :], x], axis=1)                 # k = 0
    x1 = jnp.concatenate([x[:, L - 1:, :], x, x[:, :1, :]], axis=1)    # k = 1
    x2 = jnp.concatenate([x, x[:, :2, :]], axis=1)                     # k = 2

    acc = jnp.dot(x0.reshape(B * Lc, C), w_ref[0],
                  preferred_element_type=jnp.float32)
    acc += jnp.dot(x1.reshape(B * Lc, C), w_ref[1],
                   preferred_element_type=jnp.float32)
    acc += jnp.dot(x2.reshape(B * Lc, C), w_ref[2],
                   preferred_element_type=jnp.float32)                 # (B*Lc, C) f32
    # Conv bias intentionally omitted: train-mode BatchNorm subtracts the batch mean,
    # so a per-channel shift cancels exactly (variance is shift-invariant).

    # ---- BatchNorm1d (train-mode batch stats), folded into per-channel affine -------
    inv_n = 1.0 / float(B * Lc)
    s1 = jnp.sum(acc, axis=0, keepdims=True)                           # (1, C)
    s2 = jnp.sum(acc * acc, axis=0, keepdims=True)                     # (1, C)
    mean = s1 * inv_n
    var = jnp.maximum(s2 * inv_n - mean * mean, 0.0)                   # clamp >= 0
    scale = g_ref[...] * jax.lax.rsqrt(var + BN_EPS)                   # EUP rsqrt
    shift = beta_ref[...] - mean * scale
    y = acc * scale + shift                                            # (B*Lc, C) f32

    # ---- ELU (alpha = 1) -------------------------------------------------------------
    # exp(x)-1 kept (guaranteed lowering); expm1 precision gain is below test tolerance.
    y = jnp.where(y > 0, y, jnp.exp(jnp.minimum(y, 0.0)) - 1.0)

    # ---- MaxPool1d(kernel=3, stride=2, padding=1) along L ----------------------------
    # m[l] = max(y[l-1], y[l], y[l+1]) with -inf outside; out[j] = m[2j].
    y3 = y.reshape(B, Lc, C)
    neg = jnp.full((B, 1, C), -jnp.inf, jnp.float32)
    y_prev = jnp.concatenate([neg, y3[:, :Lc - 1, :]], axis=1)
    y_next = jnp.concatenate([y3[:, 1:, :], neg], axis=1)
    m_ref[...] = jnp.maximum(jnp.maximum(y_prev, y3), y_next)
    out_ref[...] = m_ref[:, pl.ds(0, Lp, 2), :]                        # one stride-2 read


def conv_layer_forward(x, conv_w, conv_b, bn_gamma, bn_beta, *,
                       matmul_dtype=jnp.float32):
    """x: (B, L, C) -> (B, (L+1)//2 + 1, C) float32.

    matmul_dtype=jnp.bfloat16 selects the 2x-throughput MXU path (recommended on v5e);
    accumulation and BN/ELU math stay f32.  conv_b is accepted for API parity with the
    PyTorch module but unused: under train-mode BatchNorm the conv bias cancels exactly.
    """
    del conv_b  # cancels under train-mode BatchNorm (see kernel comment)
    B, L, C = x.shape
    assert L >= 2, "circular padding by 2 requires L >= 2"
    Lc = L + 2
    Lp = (Lc - 1) // 2 + 1

    wf = jnp.transpose(conv_w, (2, 1, 0)).astype(matmul_dtype)         # (3, Cin, Cout)
    g2 = bn_gamma.reshape(1, C).astype(jnp.float32)
    be2 = bn_beta.reshape(1, C).astype(jnp.float32)

    return pl.pallas_call(
        _conv_layer_kernel,
        out_shape=jax.ShapeDtypeStruct((B, Lp, C), jnp.float32),
        grid=(1,),  # small shapes: single VMEM-resident block; see TODO for L-tiling
        in_specs=[
            pl.BlockSpec((B, L, C), lambda i: (0, 0, 0)),
            pl.BlockSpec((3, C, C), lambda i: (0, 0, 0)),
            pl.BlockSpec((1, C), lambda i: (0, 0)),
            pl.BlockSpec((1, C), lambda i: (0, 0)),
        ],
        out_specs=pl.BlockSpec((B, Lp, C), lambda i: (0, 0, 0)),
        scratch_shapes=[pltpu.VMEM((B, Lc, C), jnp.float32)],
        compiler_params=pltpu.CompilerParams(
            dimension_semantics=("arbitrary",),
            vmem_limit_bytes=32 * 1024 * 1024),
    )(x.astype(matmul_dtype), wf, g2, be2)


def _reference_forward(x, conv_w, conv_b, bn_gamma, bn_beta):
    """Pure-JAX reference mirroring the PyTorch module (train-mode BatchNorm),
    including the conv bias (to verify its cancellation in the kernel)."""
    B, L, C = x.shape
    xc = jnp.transpose(x, (0, 2, 1))
    xpad = jnp.concatenate([xc[:, :, -2:], xc, xc[:, :, :2]], axis=-1)
    Lc = L + 2
    conv = jnp.zeros((B, C, Lc), jnp.float32)
    for k in range(3):
        conv = conv + jnp.einsum('oi,bil->bol', conv_w[:, :, k], xpad[:, :, k:k + Lc])
    conv = conv + conv_b[None, :, None]
    mean = conv.mean(axis=(0, 2), keepdims=True)
    var = ((conv - mean) ** 2).mean(axis=(0, 2), keepdims=True)
    y = bn_gamma[None, :, None] * (conv - mean) / jnp.sqrt(var + BN_EPS) \
        + bn_beta[None, :, None]
    y = jnp.where(y > 0, y, jnp.exp(jnp.minimum(y, 0.0)) - 1.0)
    p = jnp.pad(y, ((0, 0), (0, 0), (1, 1)), constant_values=-jnp.inf)
    Lp = (Lc - 1) // 2 + 1
    out = jnp.stack([p[:, :, 2 * j:2 * j + 3].max(axis=-1) for j in range(Lp)], axis=-1)
    return jnp.transpose(out, (0, 2, 1))


if __name__ == "__main__":
    key = jax.random.PRNGKey(0)
    kw, kb, kg, kbe, kx1, kx2 = jax.random.split(key, 6)

    B, C = 2, 8
    conv_w = jax.random.uniform(kw, (C, C, 3), jnp.float32, -0.35, 0.35)   # (out,in,k)
    conv_b = jax.random.uniform(kb, (C,), jnp.float32, -0.35, 0.35)
    bn_gamma = jax.random.uniform(kg, (C,), jnp.float32, 0.5, 1.5)
    bn_beta = 0.1 * jax.random.normal(kbe, (C,), jnp.float32)

    # L=14 -> Lc=16 (even, sublane-aligned); L=13 -> Lc=15 (odd tail path).
    for L, xkey in ((14, kx1), (13, kx2)):
        x = jax.random.normal(xkey, (B, L, C), jnp.float32)
        ref = _reference_forward(x, conv_w, conv_b, bn_gamma, bn_beta)
        expected_shape = (B, (L + 1) // 2 + 1, C)

        # f32 matmul path (PyTorch-equivalent math)
        out = jax.block_until_ready(
            conv_layer_forward(x, conv_w, conv_b, bn_gamma, bn_beta))
        assert out.shape == expected_shape, (out.shape, expected_shape)
        if not bool(jnp.allclose(out, ref, atol=2e-3, rtol=2e-3)):
            raise AssertionError(f"f32 Pallas kernel mismatch at L={L}")

        # bf16 MXU path (2x MXU throughput; f32 accumulation) — looser tolerance.
        out_bf16 = jax.block_until_ready(
            conv_layer_forward(x, conv_w, conv_b, bn_gamma, bn_beta,
                               matmul_dtype=jnp.bfloat16))
        assert out_bf16.shape == expected_shape, (out_bf16.shape, expected_shape)
        if not bool(jnp.allclose(out_bf16, ref, atol=7e-2, rtol=7e-2)):
            raise AssertionError(f"bf16 Pallas kernel mismatch at L={L}")

    print("KERNEL_OK")
</pallas_src>

<mosaic_0001>
module attributes {stable_mosaic.version = 11 : i64} {
  func.func @_conv_layer_kernel(%arg0: i32, %arg1: memref<2x14x8xf32, #tpu.memory_space<vmem>>, %arg2: memref<3x8x8xf32, #tpu.memory_space<vmem>>, %arg3: memref<1x8xf32, #tpu.memory_space<vmem>>, %arg4: memref<1x8xf32, #tpu.memory_space<vmem>>, %arg5: memref<2x8x8xf32, #tpu.memory_space<vmem>>, %arg6: memref<2x16x8xf32, #tpu.memory_space<vmem>>) attributes {dimension_semantics = [#tpu.dimension_semantics<arbitrary>], iteration_bounds = array<i64: 1>, scalar_prefetch = 0 : i64, scratch_operands = 1 : i64, tpu.core_type = #tpu.core_type<tc>, window_params = [{pipeline_mode = #tpu.pipeline_mode<synchronous>, transform_indices = @transform_0, window_bounds = array<i64: 2, 14, 8>}, {pipeline_mode = #tpu.pipeline_mode<synchronous>, transform_indices = @transform_1, window_bounds = array<i64: 3, 8, 8>}, {pipeline_mode = #tpu.pipeline_mode<synchronous>, transform_indices = @transform_2, window_bounds = array<i64: 1, 8>}, {pipeline_mode = #tpu.pipeline_mode<synchronous>, transform_indices = @transform_3, window_bounds = array<i64: 1, 8>}, {pipeline_mode = #tpu.pipeline_mode<synchronous>, transform_indices = @transform_4, window_bounds = array<i64: 2, 8, 8>}]} {
    %c0 = arith.constant 0 : index
    %c0_0 = arith.constant 0 : index
    %c0_1 = arith.constant 0 : index
    %0 = vector.load %arg1[%c0, %c0_0, %c0_1] : memref<2x14x8xf32, #tpu.memory_space<vmem>>, vector<2x14x8xf32>
    %1 = vector.extract_strided_slice %0 {offsets = [0, 12, 0], sizes = [2, 2, 8], strides = [1, 1, 1]} : vector<2x14x8xf32> to vector<2x2x8xf32>
    %2 = tpu.concatenate %1, %0 in 1 : vector<2x2x8xf32>, vector<2x14x8xf32> -> vector<2x16x8xf32>
    %3 = vector.extract_strided_slice %0 {offsets = [0, 13, 0], sizes = [2, 1, 8], strides = [1, 1, 1]} : vector<2x14x8xf32> to vector<2x1x8xf32>
    %4 = vector.extract_strided_slice %0 {offsets = [0, 0, 0], sizes = [2, 1, 8], strides = [1, 1, 1]} : vector<2x14x8xf32> to vector<2x1x8xf32>
    %5 = tpu.concatenate %3, %0, %4 in 1 : vector<2x1x8xf32>, vector<2x14x8xf32>, vector<2x1x8xf32> -> vector<2x16x8xf32>
    %6 = vector.extract_strided_slice %0 {offsets = [0, 0, 0], sizes = [2, 2, 8], strides = [1, 1, 1]} : vector<2x14x8xf32> to vector<2x2x8xf32>
    %7 = tpu.concatenate %0, %6 in 1 : vector<2x14x8xf32>, vector<2x2x8xf32> -> vector<2x16x8xf32>
    %8 = vector.shape_cast %2 : vector<2x16x8xf32> to vector<32x8xf32>
    %c0_2 = arith.constant 0 : index
    %c0_3 = arith.constant 0 : index
    %c0_4 = arith.constant 0 : index
    %9 = vector.load %arg2[%c0_2, %c0_3, %c0_4] : memref<3x8x8xf32, #tpu.memory_space<vmem>>, vector<1x8x8xf32>
    %10 = vector.shape_cast %9 : vector<1x8x8xf32> to vector<8x8xf32>
    %cst = arith.constant dense<0.000000e+00> : vector<32x8xf32>
    %11 = tpu.matmul %8, %10, %cst {dimension_numbers = #tpu.dot_dimension_numbers<[1], [0], [0], [1], [0, 0, 1, 1], [], []>} : vector<32x8xf32>, vector<8x8xf32>, vector<32x8xf32> -> vector<32x8xf32>
    %12 = vector.shape_cast %5 : vector<2x16x8xf32> to vector<32x8xf32>
    %c1 = arith.constant 1 : index
    %c0_5 = arith.constant 0 : index
    %c0_6 = arith.constant 0 : index
    %13 = vector.load %arg2[%c1, %c0_5, %c0_6] : memref<3x8x8xf32, #tpu.memory_space<vmem>>, vector<1x8x8xf32>
    %14 = vector.shape_cast %13 : vector<1x8x8xf32> to vector<8x8xf32>
    %cst_7 = arith.constant dense<0.000000e+00> : vector<32x8xf32>
    %15 = tpu.matmul %12, %14, %cst_7 {dimension_numbers = #tpu.dot_dimension_numbers<[1], [0], [0], [1], [0, 0, 1, 1], [], []>} : vector<32x8xf32>, vector<8x8xf32>, vector<32x8xf32> -> vector<32x8xf32>
    %16 = arith.addf %11, %15 : vector<32x8xf32>
    %17 = vector.shape_cast %7 : vector<2x16x8xf32> to vector<32x8xf32>
    %c2 = arith.constant 2 : index
    %c0_8 = arith.constant 0 : index
    %c0_9 = arith.constant 0 : index
    %18 = vector.load %arg2[%c2, %c0_8, %c0_9] : memref<3x8x8xf32, #tpu.memory_space<vmem>>, vector<1x8x8xf32>
    %19 = vector.shape_cast %18 : vector<1x8x8xf32> to vector<8x8xf32>
    %cst_10 = arith.constant dense<0.000000e+00> : vector<32x8xf32>
    %20 = tpu.matmul %17, %19, %cst_10 {dimension_numbers = #tpu.dot_dimension_numbers<[1], [0], [0], [1], [0, 0, 1, 1], [], []>} : vector<32x8xf32>, vector<8x8xf32>, vector<32x8xf32> -> vector<32x8xf32>
    %21 = arith.addf %16, %20 : vector<32x8xf32>
    %cst_11 = arith.constant dense<0.000000e+00> : vector<8xf32>
    %22 = vector.multi_reduction <add>, %21, %cst_11 [0] : vector<32x8xf32> to vector<8xf32>
    %23 = vector.shape_cast %22 : vector<8xf32> to vector<1x8xf32>
    %24 = arith.mulf %21, %21 : vector<32x8xf32>
    %cst_12 = arith.constant dense<0.000000e+00> : vector<8xf32>
    %25 = vector.multi_reduction <add>, %24, %cst_12 [0] : vector<32x8xf32> to vector<8xf32>
    %26 = vector.shape_cast %25 : vector<8xf32> to vector<1x8xf32>
    %cst_13 = arith.constant 3.125000e-02 : f32
    %27 = vector.broadcast %cst_13 : f32 to vector<1x8xf32>
    %28 = arith.mulf %23, %27 : vector<1x8xf32>
    %cst_14 = arith.constant 3.125000e-02 : f32
    %29 = vector.broadcast %cst_14 : f32 to vector<1x8xf32>
    %30 = arith.mulf %26, %29 : vector<1x8xf32>
    %31 = arith.mulf %28, %28 : vector<1x8xf32>
    %32 = arith.subf %30, %31 : vector<1x8xf32>
    %cst_15 = arith.constant 0.000000e+00 : f32
    %33 = vector.broadcast %cst_15 : f32 to vector<1x8xf32>
    %34 = arith.maximumf %32, %33 : vector<1x8xf32>
    %c0_16 = arith.constant 0 : index
    %c0_17 = arith.constant 0 : index
    %35 = vector.load %arg3[%c0_16, %c0_17] : memref<1x8xf32, #tpu.memory_space<vmem>>, vector<1x8xf32>
    %cst_18 = arith.constant 9.99999974E-6 : f32
    %36 = vector.broadcast %cst_18 : f32 to vector<1x8xf32>
    %37 = arith.addf %34, %36 : vector<1x8xf32>
    %38 = math.rsqrt %37 : vector<1x8xf32>
    %39 = arith.mulf %35, %38 : vector<1x8xf32>
    %c0_19 = arith.constant 0 : index
    %c0_20 = arith.constant 0 : index
    %40 = vector.load %arg4[%c0_19, %c0_20] : memref<1x8xf32, #tpu.memory_space<vmem>>, vector<1x8xf32>
    %41 = arith.mulf %28, %39 : vector<1x8xf32>
    %42 = arith.subf %40, %41 : vector<1x8xf32>
    %43 = vector.broadcast %39 : vector<1x8xf32> to vector<32x8xf32>
    %44 = arith.mulf %21, %43 : vector<32x8xf32>
    %45 = vector.broadcast %42 : vector<1x8xf32> to vector<32x8xf32>
    %46 = arith.addf %44, %45 : vector<32x8xf32>
    %cst_21 = arith.constant 0.000000e+00 : f32
    %47 = vector.broadcast %cst_21 : f32 to vector<32x8xf32>
    %48 = arith.cmpf ogt, %46, %47 : vector<32x8xf32>
    %cst_22 = arith.constant 0.000000e+00 : f32
    %49 = vector.broadcast %cst_22 : f32 to vector<32x8xf32>
    %50 = arith.minimumf %46, %49 : vector<32x8xf32>
    %51 = math.exp %50 : vector<32x8xf32>
    %cst_23 = arith.constant 1.000000e+00 : f32
    %52 = vector.broadcast %cst_23 : f32 to vector<32x8xf32>
    %53 = arith.subf %51, %52 : vector<32x8xf32>
    %54 = arith.select %48, %46, %53 : vector<32x8xi1>, vector<32x8xf32>
    %55 = vector.shape_cast %54 : vector<32x8xf32> to vector<2x16x8xf32>
    %cst_24 = arith.constant 0xFF800000 : f32
    %56 = vector.broadcast %cst_24 : f32 to vector<2x1x8xf32>
    %57 = vector.extract_strided_slice %55 {offsets = [0, 0, 0], sizes = [2, 15, 8], strides = [1, 1, 1]} : vector<2x16x8xf32> to vector<2x15x8xf32>
    %58 = tpu.concatenate %56, %57 in 1 : vector<2x1x8xf32>, vector<2x15x8xf32> -> vector<2x16x8xf32>
    %59 = vector.extract_strided_slice %55 {offsets = [0, 1, 0], sizes = [2, 15, 8], strides = [1, 1, 1]} : vector<2x16x8xf32> to vector<2x15x8xf32>
    %60 = tpu.concatenate %59, %56 in 1 : vector<2x15x8xf32>, vector<2x1x8xf32> -> vector<2x16x8xf32>
    %61 = arith.maximumf %58, %55 : vector<2x16x8xf32>
    %62 = arith.maximumf %61, %60 : vector<2x16x8xf32>
    %c0_25 = arith.constant 0 : index
    %c0_26 = arith.constant 0 : index
    %c0_27 = arith.constant 0 : index
    %63 = vector.load %arg6[%c0_25, %c0_26, %c0_27] : memref<2x16x8xf32, #tpu.memory_space<vmem>>, vector<2x16x8xf32>
    tpu.vector_store %arg6[%c0_25, %c0_26, %c0_27], %62 {strides = array<i32>} : memref<2x16x8xf32, #tpu.memory_space<vmem>>, vector<2x16x8xf32>,
    %c0_28 = arith.constant 0 : index
    %c0_29 = arith.constant 0 : index
    %c0_30 = arith.constant 0 : index
    %64 = tpu.strided_load %arg6[%c0_28, %c0_29, %c0_30] {strides = array<i32: 1, 2, 1>} : memref<2x16x8xf32, #tpu.memory_space<vmem>>, vector<2x8x8xf32>
    %c0_31 = arith.constant 0 : index
    %c0_32 = arith.constant 0 : index
    %c0_33 = arith.constant 0 : index
    %65 = vector.load %arg5[%c0_31, %c0_32, %c0_33] : memref<2x8x8xf32, #tpu.memory_space<vmem>>, vector<2x8x8xf32>
    tpu.vector_store %arg5[%c0_31, %c0_32, %c0_33], %64 {strides = array<i32>} : memref<2x8x8xf32, #tpu.memory_space<vmem>>, vector<2x8x8xf32>,
    return
  }
  func.func @transform_0(%arg0: i32) -> (i32, i32, i32) {
    %c0_i32 = arith.constant 0 : i32
    %c0_i32_0 = arith.constant 0 : i32
    %c0_i32_1 = arith.constant 0 : i32
    %c0_i32_2 = arith.constant 0 : i32
    return %c0_i32, %c0_i32_0, %c0_i32_1 : i32, i32, i32
  }
  func.func @transform_1(%arg0: i32) -> (i32, i32, i32) {
    %c0_i32 = arith.constant 0 : i32
    %c0_i32_0 = arith.constant 0 : i32
    %c0_i32_1 = arith.constant 0 : i32
    %c0_i32_2 = arith.constant 0 : i32
    return %c0_i32, %c0_i32_0, %c0_i32_1 : i32, i32, i32
  }
  func.func @transform_2(%arg0: i32) -> (i32, i32) {
    %c0_i32 = arith.constant 0 : i32
    %c0_i32_0 = arith.constant 0 : i32
    %c0_i32_1 = arith.constant 0 : i32
    return %c0_i32, %c0_i32_0 : i32, i32
  }
  func.func @transform_3(%arg0: i32) -> (i32, i32) {
    %c0_i32 = arith.constant 0 : i32
    %c0_i32_0 = arith.constant 0 : i32
    %c0_i32_1 = arith.constant 0 : i32
    return %c0_i32, %c0_i32_0 : i32, i32
  }
  func.func @transform_4(%arg0: i32) -> (i32, i32, i32) {
    %c0_i32 = arith.constant 0 : i32
    %c0_i32_0 = arith.constant 0 : i32
    %c0_i32_1 = arith.constant 0 : i32
    %c0_i32_2 = arith.constant 0 : i32
    return %c0_i32, %c0_i32_0, %c0_i32_1 : i32, i32, i32
  }
}

</mosaic_0001>

<llo_original>
// kernel: tpu_custom_call.1
$region0: #{tpu_custom_call.1}
  #allocation0 [shape = 'u32[]', space=smem, size = 0x4, offset = 0x4, fixed_abs, tag = 'smem constant byte address 0x4 - core index']
  #allocation1 [shape = 'u32[144,128]{1,0:T(1,128)}', space=vmem, size = 0x12000, scoped, tag = 'internal scratch']
  #allocation2 [shape = 'f32[2,16,8]{2,1,0:T(8,128)}', space=vmem, size = 0x4000, scoped, tag = 'scratch operand']
  %s0 = inlined_call_operand.vmem [shape: f32[2,14,8], index: 0, kind: input, shape index: {}]
  %s1 = inlined_call_operand.vmem [shape: f32[3,8,8], index: 1, kind: input, shape index: {}]
  %s2 = inlined_call_operand.vmem [shape: f32[1,8], index: 2, kind: input, shape index: {}]
  %s3 = inlined_call_operand.vmem [shape: f32[1,8], index: 3, kind: input, shape index: {}]
  %s4 = inlined_call_operand.hbm [shape: f32[2,8,8], index: 4, kind: output, shape index: {}]
  %s5 = sld [smem:[#allocation0]]
  $region26: #{tpu_custom_call.1} parent=0
    _
  %s7 = ssub.s32 1, %s5
  %s8 = scalar_select 0, %s7, %s5
  $region1: #{tpu_custom_call.1} parent=0
    #allocation3 [shape = 'u8[8192]{0}', space=vmem, size = 0x2000, scoped, tag = 'output window, operand 0, single buffered']
    #allocation4 [shape = 's32[1]{0}', space=sflag, size = 0x4, scoped, tag = 'scoped memory for tpu_custom_call.1']
    %9 = vsyncpa [#allocation4], 0
    // Predicated region
    $region2: #{tpu_custom_call.1} parent=1 // pred_check
      _
    $region3: #{tpu_custom_call.1} parent=1 // pred_check_branch
      %11 = sbr.rel (0) target = $region5
    $region4: #{tpu_custom_call.1} parent=1 // pred_region
      _
    $region5: #{tpu_custom_call.1} parent=1 // pred_fallthru
      _
    // Predicated region
    $region6: #{tpu_custom_call.1} parent=1 // pred_check
      _
    $region7: #{tpu_custom_call.1} parent=1 // pred_check_branch
      %13 = sbr.rel (0) target = $region9
    $region8: #{tpu_custom_call.1} parent=1 // pred_region
      _
    $region9: #{tpu_custom_call.1} parent=1 // pred_fallthru
      _
    // Predicated region
    $region10: #{tpu_custom_call.1} parent=1 // pred_check
      _
    $region11: #{tpu_custom_call.1} parent=1 // pred_check_branch
      %15 = sbr.rel (0) target = $region13
    $region12: #{tpu_custom_call.1} parent=1 // pred_region
      _
    $region13: #{tpu_custom_call.1} parent=1 // pred_fallthru
      _
    // Predicated region
    $region14: #{tpu_custom_call.1} parent=1 // pred_check
      _
    $region15: #{tpu_custom_call.1} parent=1 // pred_check_branch
      %17 = sbr.rel (0) target = $region17
    $region16: #{tpu_custom_call.1} parent=1 // pred_region
      _
    $region17: #{tpu_custom_call.1} parent=1 // pred_fallthru
      _
    %v18 = vld [vmem:[%s0] sm:$0xff]
    %v19 = vld [vmem:[%s0 + $0x8] sm:$0x3f]
    %v20 = vld [vmem:[%s0 + $0x10] sm:$0xff]
    %v21 = vld [vmem:[%s0 + $0x18] sm:$0x3f]
    %v24 = vrot.slane %v19, 4
    %v25 = vrot.slane %v21, 4
    %vm30 = vcmask 1041408
    %v31 = vrot.slane %v18, 6
    %v32 = vrot.slane %v19, 6
    %v33 = vsel %vm30, %v31, %v32
    %v34 = vrot.slane %v20, 6
    %v35 = vrot.slane %v21, 6
    %v36 = vsel %vm30, %v34, %v35
    %v39 = vsel %vm30, %v24, %v31
    %v40 = vsel %vm30, %v25, %v34
    %v41 = vrot.slane %v19, 5
    %v42 = vrot.slane %v21, 5
    %vm45 = vcmask 1040384
    %v46 = vrot.slane %v18, 7
    %v47 = vrot.slane %v19, 7
    %v48 = vsel %vm45, %v46, %v47
    %v49 = vrot.slane %v20, 7
    %v50 = vrot.slane %v21, 7
    %v51 = vsel %vm45, %v49, %v50
    %v56 = vrot.slane %v18, 1
    %v57 = vrot.slane %v20, 1
    %v60 = vsel %vm45, %v41, %v46
    %v61 = vsel %vm45, %v42, %v49
    %vm62 = vcmask 1046528
    %v63 = vsel %vm62, %v48, %v56
    %v64 = vsel %vm62, %v51, %v57
    %v65 = vrot.slane %v18, 2
    %v66 = vrot.slane %v20, 2
    %vm69 = vcmask 1045504
    %v70 = vsel %vm69, %v19, %v65
    %v71 = vsel %vm69, %v21, %v66
    %v72 = vld [vmem:[%s1] sm:$0xff]
    %s73 = scalar_lea.vmem %s1, 8
    %v74 = vld [vmem:[%s73] sm:$0xff]
    %vm75 = vcmask 64512
    %v77 = vsel %vm75, %v60, 0
    %v80 = vsel %vm75, %v63, 0
    %v83 = vsel %vm75, %v61, 0
    %v86 = vsel %vm75, %v64, 0
    %88 = vmatprep.subr.mxu0 0.0
    %89 = vmatpush1.msra.mxu0 0.0
    %90 = vmatprep.subr.mxu0 0.0
    %91 = vmatpush1.msra.mxu0 0.0
    %92 = vmatprep.subr.mxu0 0.0
    %93 = vmatpush1.msra.mxu0 0.0
    %94 = vmatprep.subr.mxu0 0.0
    %95 = vmatpush1.msra.mxu0 0.0
    %96 = vmatprep.subr.mxu0 0.0
    %97 = vmatpush1.msra.mxu0 0.0
    %98 = vmatprep.subr.mxu0 0.0
    %99 = vmatpush1.msra.mxu0 0.0
    %100 = vmatprep.subr.mxu0 0.0
    %101 = vmatpush1.msra.mxu0 0.0
    %102 = vmatprep.subr.mxu0 0.0
    %103 = vmatpush1.msra.mxu0 0.0
    %104 = vmatprep.subr.mxu0 0.0
    %105 = vmatpush1.msra.mxu0 0.0
    %106 = vmatprep.subr.mxu0 0.0
    %107 = vmatpush1.msra.mxu0 0.0
    %108 = vmatprep.subr.mxu0 0.0
    %109 = vmatpush1.msra.mxu0 0.0
    %110 = vmatprep.subr.mxu0 0.0
    %111 = vmatpush1.msra.mxu0 0.0
    %112 = vmatprep.subr.mxu0 0.0
    %113 = vmatpush1.msra.mxu0 0.0
    %114 = vmatprep.subr.mxu0 0.0
    %115 = vmatpush1.msra.mxu0 0.0
    %116 = vmatprep.subr.mxu0 0.0
    %117 = vmatpush1.msra.mxu0 0.0
    %118 = vmatprep.subr.mxu0 0.0
    %119 = vmatpush1.msra.mxu0 %v74
    %120 = vmatprep.subr.mxu0 0.0
    %121 = vmatpush2.msra.mxu0 0.0
    %122 = vmatprep.subr.mxu0 0.0
    %123 = vmatpush2.msra.mxu0 0.0
    %124 = vmatprep.subr.mxu0 0.0
    %125 = vmatpush2.msra.mxu0 0.0
    %126 = vmatprep.subr.mxu0 0.0
    %127 = vmatpush2.msra.mxu0 0.0
    %128 = vmatprep.subr.mxu0 0.0
    %129 = vmatpush2.msra.mxu0 0.0
    %130 = vmatprep.subr.mxu0 0.0
    %131 = vmatpush2.msra.mxu0 0.0
    %132 = vmatprep.subr.mxu0 0.0
    %133 = vmatpush2.msra.mxu0 0.0
    %134 = vmatprep.subr.mxu0 0.0
    %135 = vmatpush2.msra.mxu0 0.0
    %136 = vmatprep.subr.mxu0 0.0
    %137 = vmatpush2.msra.mxu0 0.0
    %138 = vmatprep.subr.mxu0 0.0
    %139 = vmatpush2.msra.mxu0 0.0
    %140 = vmatprep.subr.mxu0 0.0
    %141 = vmatpush2.msra.mxu0 0.0
    %142 = vmatprep.subr.mxu0 0.0
    %143 = vmatpush2.msra.mxu0 0.0
    %144 = vmatprep.subr.mxu0 0.0
    %145 = vmatpush2.msra.mxu0 0.0
    %146 = vmatprep.subr.mxu0 0.0
    %147 = vmatpush2.msra.mxu0 0.0
    %148 = vmatprep.subr.mxu0 0.0
    %149 = vmatpush2.msra.mxu0 0.0
    %150 = vmatprep.subr.mxu0 0.0
    %151 = vmatpush2.msra.mxu0 0.0
    %152 = vmatprep.mubr.f32.mxu0 0.0
    %153 = vmatmul.mubr.f32.gmra.mxu0 %v77
    %v154 = vpop.f32.mrf.mxu0
    %v155 = vadd.f32 0.0, %v154
    %v156 = vpop.f32.mrf.mxu0
    %157 = vmatprep.mubr.f32.mxu0 0.0
    %158 = vmatmul.mubr.f32.gmra.mxu0 %v80
    %v159 = vpop.f32.mrf.mxu0
    %v160 = vadd.f32 0.0, %v159
    %v161 = vpop.f32.mrf.mxu0
    %162 = vmatprep.mubr.f32.mxu0 0.0
    %163 = vmatmul.mubr.f32.gmra.mxu0 %v83
    %v164 = vpop.f32.mrf.mxu0
    %v165 = vadd.f32 0.0, %v164
    %v166 = vpop.f32.mrf.mxu0
    %167 = vmatprep.mubr.f32.mxu0 0.0
    %168 = vmatmul.mubr.f32.gmra.mxu0 %v86
    %v169 = vpop.f32.mrf.mxu0
    %v170 = vadd.f32 0.0, %v169
    %v171 = vpop.f32.mrf.mxu0
    %172 = vdwg.mxu0
    %v174 = vsel %vm75, %v39, 0
    %v176 = vsel %vm75, %v33, 0
    %v179 = vsel %vm75, %v40, 0
    %v181 = vsel %vm75, %v36, 0
    %183 = vmatprep.subr.mxu0 0.0
    %184 = vmatpush1.msra.mxu0 0.0
    %185 = vmatprep.subr.mxu0 0.0
    %186 = vmatpush1.msra.mxu0 0.0
    %187 = vmatprep.subr.mxu0 0.0
    %188 = vmatpush1.msra.mxu0 0.0
    %189 = vmatprep.subr.mxu0 0.0
    %190 = vmatpush1.msra.mxu0 0.0
    %191 = vmatprep.subr.mxu0 0.0
    %192 = vmatpush1.msra.mxu0 0.0
    %193 = vmatprep.subr.mxu0 0.0
    %194 = vmatpush1.msra.mxu0 0.0
    %195 = vmatprep.subr.mxu0 0.0
    %196 = vmatpush1.msra.mxu0 0.0
    %197 = vmatprep.subr.mxu0 0.0
    %198 = vmatpush1.msra.mxu0 0.0
    %199 = vmatprep.subr.mxu0 0.0
    %200 = vmatpush1.msra.mxu0 0.0
    %201 = vmatprep.subr.mxu0 0.0
    %202 = vmatpush1.msra.mxu0 0.0
    %203 = vmatprep.subr.mxu0 0.0
    %204 = vmatpush1.msra.mxu0 0.0
    %205 = vmatprep.subr.mxu0 0.0
    %206 = vmatpush1.msra.mxu0 0.0
    %207 = vmatprep.subr.mxu0 0.0
    %208 = vmatpush1.msra.mxu0 0.0
    %209 = vmatprep.subr.mxu0 0.0
    %210 = vmatpush1.msra.mxu0 0.0
    %211 = vmatprep.subr.mxu0 0.0
    %212 = vmatpush1.msra.mxu0 0.0
    %213 = vmatprep.subr.mxu0 0.0
    %214 = vmatpush1.msra.mxu0 %v72
    %215 = vmatprep.subr.mxu0 0.0
    %216 = vmatpush2.msra.mxu0 0.0
    %217 = vmatprep.subr.mxu0 0.0
    %218 = vmatpush2.msra.mxu0 0.0
    %219 = vmatprep.subr.mxu0 0.0
    %220 = vmatpush2.msra.mxu0 0.0
    %221 = vmatprep.subr.mxu0 0.0
    %222 = vmatpush2.msra.mxu0 0.0
    %223 = vmatprep.subr.mxu0 0.0
    %224 = vmatpush2.msra.mxu0 0.0
    %225 = vmatprep.subr.mxu0 0.0
    %226 = vmatpush2.msra.mxu0 0.0
    %227 = vmatprep.subr.mxu0 0.0
    %228 = vmatpush2.msra.mxu0 0.0
    %229 = vmatprep.subr.mxu0 0.0
    %230 = vmatpush2.msra.mxu0 0.0
    %231 = vmatprep.subr.mxu0 0.0
    %232 = vmatpush2.msra.mxu0 0.0
    %233 = vmatprep.subr.mxu0 0.0
    %234 = vmatpush2.msra.mxu0 0.0
    %235 = vmatprep.subr.mxu0 0.0
    %236 = vmatpush2.msra.mxu0 0.0
    %237 = vmatprep.subr.mxu0 0.0
    %238 = vmatpush2.msra.mxu0 0.0
    %239 = vmatprep.subr.mxu0 0.0
    %240 = vmatpush2.msra.mxu0 0.0
    %241 = vmatprep.subr.mxu0 0.0
    %242 = vmatpush2.msra.mxu0 0.0
    %243 = vmatprep.subr.mxu0 0.0
    %244 = vmatpush2.msra.mxu0 0.0
    %245 = vmatprep.subr.mxu0 0.0
    %246 = vmatpush2.msra.mxu0 0.0
    %247 = vmatprep.mubr.f32.mxu0 0.0
    %248 = vmatmul.mubr.f32.gmra.mxu0 %v174
    %v249 = vpop.f32.mrf.mxu0
    %v250 = vadd.f32 %v155, %v249
    %v251 = vpop.f32.mrf.mxu0
    %252 = vmatprep.mubr.f32.mxu0 0.0
    %253 = vmatmul.mubr.f32.gmra.mxu0 %v176
    %v254 = vpop.f32.mrf.mxu0
    %v255 = vadd.f32 %v160, %v254
    %v256 = vpop.f32.mrf.mxu0
    %257 = vmatprep.mubr.f32.mxu0 0.0
    %258 = vmatmul.mubr.f32.gmra.mxu0 %v179
    %v259 = vpop.f32.mrf.mxu0
    %v260 = vadd.f32 %v165, %v259
    %v261 = vpop.f32.mrf.mxu0
    %262 = vmatprep.mubr.f32.mxu0 0.0
    %263 = vmatmul.mubr.f32.gmra.mxu0 %v181
    %v264 = vpop.f32.mrf.mxu0
    %v265 = vadd.f32 %v170, %v264
    %v266 = vpop.f32.mrf.mxu0
    %267 = vdwg.mxu0
    %s268 = scalar_lea.vmem %s1, 16
    %v269 = vld [vmem:[%s268] sm:$0xff]
    %v270 = vsel %vm75, %v18, 0
    %v273 = vsel %vm75, %v70, 0
    %v275 = vsel %vm75, %v20, 0
    %v278 = vsel %vm75, %v71, 0
    %280 = vmatprep.subr.mxu0 0.0
    %281 = vmatpush1.msra.mxu0 0.0
    %282 = vmatprep.subr.mxu0 0.0
    %283 = vmatpush1.msra.mxu0 0.0
    %284 = vmatprep.subr.mxu0 0.0
    %285 = vmatpush1.msra.mxu0 0.0
    %286 = vmatprep.subr.mxu0 0.0
    %287 = vmatpush1.msra.mxu0 0.0
    %288 = vmatprep.subr.mxu0 0.0
    %289 = vmatpush1.msra.mxu0 0.0
    %290 = vmatprep.subr.mxu0 0.0
    %291 = vmatpush1.msra.mxu0 0.0
    %292 = vmatprep.subr.mxu0 0.0
    %293 = vmatpush1.msra.mxu0 0.0
    %294 = vmatprep.subr.mxu0 0.0
    %295 = vmatpush1.msra.mxu0 0.0
    %296 = vmatprep.subr.mxu0 0.0
    %297 = vmatpush1.msra.mxu0 0.0
    %298 = vmatprep.subr.mxu0 0.0
    %299 = vmatpush1.msra.mxu0 0.0
    %300 = vmatprep.subr.mxu0 0.0
    %301 = vmatpush1.msra.mxu0 0.0
    %302 = vmatprep.subr.mxu0 0.0
    %303 = vmatpush1.msra.mxu0 0.0
    %304 = vmatprep.subr.mxu0 0.0
    %305 = vmatpush1.msra.mxu0 0.0
    %306 = vmatprep.subr.mxu0 0.0
    %307 = vmatpush1.msra.mxu0 0.0
    %308 = vmatprep.subr.mxu0 0.0
    %309 = vmatpush1.msra.mxu0 0.0
    %310 = vmatprep.subr.mxu0 0.0
    %311 = vmatpush1.msra.mxu0 %v269
    %312 = vmatprep.subr.mxu0 0.0
    %313 = vmatpush2.msra.mxu0 0.0
    %314 = vmatprep.subr.mxu0 0.0
    %315 = vmatpush2.msra.mxu0 0.0
    %316 = vmatprep.subr.mxu0 0.0
    %317 = vmatpush2.msra.mxu0 0.0
    %318 = vmatprep.subr.mxu0 0.0
    %319 = vmatpush2.msra.mxu0 0.0
    %320 = vmatprep.subr.mxu0 0.0
    %321 = vmatpush2.msra.mxu0 0.0
    %322 = vmatprep.subr.mxu0 0.0
    %323 = vmatpush2.msra.mxu0 0.0
    %324 = vmatprep.subr.mxu0 0.0
    %325 = vmatpush2.msra.mxu0 0.0
    %326 = vmatprep.subr.mxu0 0.0
    %327 = vmatpush2.msra.mxu0 0.0
    %328 = vmatprep.subr.mxu0 0.0
    %329 = vmatpush2.msra.mxu0 0.0
    %330 = vmatprep.subr.mxu0 0.0
    %331 = vmatpush2.msra.mxu0 0.0
    %332 = vmatprep.subr.mxu0 0.0
    %333 = vmatpush2.msra.mxu0 0.0
    %334 = vmatprep.subr.mxu0 0.0
    %335 = vmatpush2.msra.mxu0 0.0
    %336 = vmatprep.subr.mxu0 0.0
    %337 = vmatpush2.msra.mxu0 0.0
    %338 = vmatprep.subr.mxu0 0.0
    %339 = vmatpush2.msra.mxu0 0.0
    %340 = vmatprep.subr.mxu0 0.0
    %341 = vmatpush2.msra.mxu0 0.0
    %342 = vmatprep.subr.mxu0 0.0
    %343 = vmatpush2.msra.mxu0 0.0
    %344 = vmatprep.mubr.f32.mxu0 0.0
    %345 = vmatmul.mubr.f32.gmra.mxu0 %v270
    %v346 = vpop.f32.mrf.mxu0
    %v347 = vadd.f32 0.0, %v346
    %v348 = vpop.f32.mrf.mxu0
    %349 = vmatprep.mubr.f32.mxu0 0.0
    %350 = vmatmul.mubr.f32.gmra.mxu0 %v273
    %v351 = vpop.f32.mrf.mxu0
    %v352 = vadd.f32 0.0, %v351
    %v353 = vpop.f32.mrf.mxu0
    %354 = vmatprep.mubr.f32.mxu0 0.0
    %355 = vmatmul.mubr.f32.gmra.mxu0 %v275
    %v356 = vpop.f32.mrf.mxu0
    %v357 = vadd.f32 0.0, %v356
    %v358 = vpop.f32.mrf.mxu0
    %359 = vmatprep.mubr.f32.mxu0 0.0
    %360 = vmatmul.mubr.f32.gmra.mxu0 %v278
    %v361 = vpop.f32.mrf.mxu0
    %v362 = vadd.f32 0.0, %v361
    %v363 = vpop.f32.mrf.mxu0
    %364 = vdwg.mxu0
    %v365 = vadd.f32 %v250, %v347
    %v366 = vadd.f32 %v255, %v352
    %v367 = vadd.f32 %v260, %v357
    %v368 = vadd.f32 %v265, %v362
    %v369 = vsel %vm75, %v365, 0.0
    %v370 = vsel %vm75, %v366, 0.0
    %v371 = vadd.f32 %v369, %v370
    %v372 = vsel %vm75, %v367, 0.0
    %v373 = vadd.f32 %v371, %v372
    %v374 = vsel %vm75, %v368, 0.0
    %v375 = vadd.f32 %v373, %v374
    %v376 = vrot.slane %v375, 4
    %v377 = vadd.f32 %v375, %v376
    %v378 = vrot.slane %v377, 2
    %v379 = vadd.f32 %v377, %v378
    %v380 = vrot.slane %v379, 1
    %v381 = vadd.f32 %v379, %v380
    %v382 = vmul.f32 %v365, %v365
    %v383 = vmul.f32 %v366, %v366
    %v384 = vmul.f32 %v367, %v367
    %v385 = vmul.f32 %v368, %v368
    %v386 = vsel %vm75, %v382, 0.0
    %v387 = vsel %vm75, %v383, 0.0
    %v388 = vadd.f32 %v386, %v387
    %v389 = vsel %vm75, %v384, 0.0
    %v390 = vadd.f32 %v388, %v389
    %v391 = vsel %vm75, %v385, 0.0
    %v392 = vadd.f32 %v390, %v391
    %v393 = vrot.slane %v392, 4
    %v394 = vadd.f32 %v392, %v393
    %v395 = vrot.slane %v394, 2
    %v396 = vadd.f32 %v394, %v395
    %v397 = vrot.slane %v396, 1
    %v398 = vadd.f32 %v396, %v397
    %v399 = vmul.f32 %v381, 0.03125
    %v400 = vmul.f32 %v398, 0.03125
    %v401 = vmul.f32 %v399, %v399
    %v402 = vsub.f32 %v400, %v401
    %v403 = vmax.f32 %v402, 0.0
    %v404 = vld [vmem:[%s2] sm:$0x1]
    %v405 = vadd.f32 %v403, 1e-05
    %v406 = vrsqrt.pop %v405
    %v407 = vmul.f32 %v404, %v406
    %v408 = vld [vmem:[%s3] sm:$0x1]
    %v409 = vmul.f32 %v399, %v407
    %v410 = vsub.f32 %v408, %v409
    %v412 = vlaneseq
    %v413 = vshrl.u32 %v412, 7
    %v414 = vsub.s32 0, %v413
    %v415 = vrot.slane %v407, %v414
    %v417 = vmul.f32 %v365, %v415
    %v418 = vmul.f32 %v366, %v415
    %v419 = vmul.f32 %v367, %v415
    %v420 = vmul.f32 %v368, %v415
    %v422 = vlaneseq
    %v423 = vshrl.u32 %v422, 7
    %v424 = vsub.s32 0, %v423
    %v425 = vrot.slane %v410, %v424
    %v427 = vadd.f32 %v417, %v425
    %v428 = vadd.f32 %v418, %v425
    %v429 = vadd.f32 %v419, %v425
    %v430 = vadd.f32 %v420, %v425
    %vm431 = vcmp.gt.f32.partialorder %v427, 0.0
    %vm432 = vcmp.gt.f32.partialorder %v428, 0.0
    %vm433 = vcmp.gt.f32.partialorder %v429, 0.0
    %vm434 = vcmp.gt.f32.partialorder %v430, 0.0
    %v435 = vmin.f32 %v427, 0.0
    %v436 = vmin.f32 %v428, 0.0
    %v437 = vmin.f32 %v429, 0.0
    %v438 = vmin.f32 %v430, 0.0
    %v439 = vmul.f32 %v435, 1.442695
    %v440 = vpow.pop %v439
    %v441 = vmul.f32 %v436, 1.442695
    %v442 = vpow.pop %v441
    %v443 = vmul.f32 %v437, 1.442695
    %v444 = vpow.pop %v443
    %v445 = vmul.f32 %v438, 1.442695
    %v446 = vpow.pop %v445
    %v447 = vsub.f32 %v440, 1.0
    %v448 = vsub.f32 %v442, 1.0
    %v449 = vsub.f32 %v444, 1.0
    %v450 = vsub.f32 %v446, 1.0
    %v451 = vsel %vm431, %v427, %v447
    %v452 = vsel %vm432, %v428, %v448
    %v453 = vsel %vm433, %v429, %v449
    %v454 = vsel %vm434, %v430, %v450
    %v459 = vrot.slane %v451, 7
    %v460 = vrot.slane %v452, 7
    %v461 = vsel %vm45, %v459, %v460
    %v462 = vrot.slane %v453, 7
    %v463 = vrot.slane %v454, 7
    %v464 = vsel %vm45, %v462, %v463
    %v469 = vsel %vm45, -inf, %v459
    %v470 = vsel %vm45, -inf, %v462
    %v471 = vrot.slane %v451, 1
    %v472 = vrot.slane %v452, 1
    %v473 = vsel %vm62, %v471, %v472
    %v474 = vrot.slane %v453, 1
    %v475 = vrot.slane %v454, 1
    %v476 = vsel %vm62, %v474, %v475
    %v481 = vsel %vm62, %v472, -inf
    %v482 = vsel %vm62, %v475, -inf
    %v483 = vmax.f32 %v469, %v451
    %v484 = vmax.f32 %v461, %v452
    %v485 = vmax.f32 %v470, %v453
    %v486 = vmax.f32 %v464, %v454
    %v487 = vmax.f32 %v483, %v473
    %v488 = vmax.f32 %v484, %v481
    %v489 = vmax.f32 %v485, %v476
    %v490 = vmax.f32 %v486, %v482
    %491 = vst.msk [vmem:[#allocation2] sm:$0xff] %vm75, %v487
    %492 = vst.msk [vmem:[#allocation2 + $0x8] sm:$0xff] %vm75, %v488
    %493 = vst.msk [vmem:[#allocation2 + $0x10] sm:$0xff] %vm75, %v489
    %494 = vst.msk [vmem:[#allocation2 + $0x18] sm:$0xff] %vm75, %v490
    %v495 = vld [vmem:[#allocation2] ss:$2 sm:$0xff]
    %s496 = scalar_lea.vmem [#allocation2], 16
    %v497 = vld [vmem:[%s496] ss:$2 sm:$0xff]
    %498 = vst.msk [vmem:[#allocation3] sm:$0xff] %vm75, %v495
    %499 = vst.msk [vmem:[#allocation3 + $0x8] sm:$0xff] %vm75, %v497
    // Predicated region
    $region18: #{tpu_custom_call.1} parent=1 // pred_check
      _
    $region19: #{tpu_custom_call.1} parent=1 // pred_check_branch
      %501 = sbr.rel (0) target = $region21
    $region20: #{tpu_custom_call.1} parent=1 // pred_region
      %s503 = ssub.s32 256, 256
      %504 = vsyncadd [#allocation4], %s503
      %s505 = sshll.u32 [#allocation3], 4
      %s506 = int_to_ptr.vmem [resolvable:$true] %s505
      %511 = dma.vmem_to_hbm [thread:$0]  %s506, 256, %s4, [#allocation4], 128, 128, 8
    $region21: #{tpu_custom_call.1} parent=1 // pred_fallthru
      _
    // Predicated region
    $region22: #{tpu_custom_call.1} parent=1 // pred_check
      _
    $region23: #{tpu_custom_call.1} parent=1 // pred_check_branch
      %513 = sbr.rel (0) target = $region25
    $region24: #{tpu_custom_call.1} parent=1 // pred_region
      %514 = dma.done [#allocation4], 256
    $region25: #{tpu_custom_call.1} parent=1 // pred_fallthru
      _
    %515 = vsyncpa [#allocation4], 1

</llo_original>
